<compile_context>
chip_gen: v5e
topology: v5e:2x2
jax: 0.10.0
libtpu: 0.0.40
codegen_flags: <defaults>
</compile_context>

<pallas_src>
import jax
import jax.numpy as jnp
import numpy as np
from jax.experimental import pallas as pl
from jax.experimental.pallas import tpu as pltpu

L = 245            # sequence length implied by Linear(245, C) and x.view(-1, 245)
LP = 256           # lane-padded length (multiple of 128)
HIDDEN_CH = 4      # out_channels of the k=1 conv inside each block
NUM_CLASSES = 10
BN_EPS = 1e-5


def _round_up(v, m):
    return (v + m - 1) // m * m


def _select_compute_dtype():
    """bf16 activations only where the VPU packs bf16 (v6e / v7x); f32 otherwise."""
    try:
        kind = jax.devices()[0].device_kind.lower()
    except Exception:
        return jnp.float32
    if "v6" in kind or "v7" in kind:
        return jnp.bfloat16
    return jnp.float32


def convnet_kernel(x_ref,
                   a1_ref, b1_ref, w1_ref, c1_ref,
                   a2_ref, b2_ref, w2_ref, c2_ref,
                   mask_ref, wl_ref, bl_ref,
                   out_ref):
    """ConvNet forward for one batch tile.

    x_ref  : (TB, LP)  cdt VMEM  input tile (channel dim squeezed, lanes 245.. are 0)
    a*_ref : (4,)      f32 SMEM  folded Conv1d(1->4,k=1) weight * BN1 scale
    b*_ref : (4, LP)   cdt VMEM  folded Conv1d(1->4,k=1) bias + BN1 shift, pad lanes = 0
    w*_ref : (4, 3)    f32 SMEM  Conv1d(4->1,k=3) taps * BN2 scale
    c*_ref : (1,)      f32 SMEM  folded Conv1d(4->1,k=3) bias + BN2 shift
    mask_ref:(1, LP)   cdt VMEM  {1,1,...,1,0,...,0}  (0 on lanes >= 245)
    wl_ref : (LP, CP)  cdt VMEM  linear weight (transposed, zero-padded)
    bl_ref : (1, CP)   f32 VMEM  linear bias (zero-padded)
    out_ref: (TB, CP)  f32 VMEM  logits (padded)
    """
    x = x_ref[...]
    cdt = x.dtype
    mask = mask_ref[...]                         # re-zeroes pad lanes after each block

    def residual_block(x, a_ref, bias_ref, w_ref, c_ref):
        p0 = p1 = p2 = None
        for ch in range(HIDDEN_CH):
            # Conv1d(1->4, k=1) + BatchNorm1d(4) + ReLU (folded affine), channel ch.
            # bias row has zero pad lanes, so h == 0 on lanes >= 245 (needed below).
            h = jnp.maximum(a_ref[ch].astype(cdt) * x + bias_ref[ch, :], 0.0)
            # Per-tap partial sums for the Conv1d(4->1, k=3, pad=1) + BN2.
            t0 = w_ref[ch, 0].astype(cdt) * h
            t1 = w_ref[ch, 1].astype(cdt) * h
            t2 = w_ref[ch, 2].astype(cdt) * h
            p0 = t0 if p0 is None else p0 + t0
            p1 = t1 if p1 is None else p1 + t1
            p2 = t2 if p2 is None else p2 + t2
        # k=3 conv as 2 lane rolls over the per-tap accumulators:
        #   roll(p0, 1)     puts p0[l-1] at lane l (lane 0 picks up zeroed lane 255)
        #   roll(p2, LP-1)  puts p2[l+1] at lane l (lane 244 picks up zeroed lane 245)
        acc = pltpu.roll(p0, 1, axis=1) + p1 + pltpu.roll(p2, LP - 1, axis=1)
        # conv bias / BN shift + residual add + ReLU, then mask pad lanes back to 0.
        return jnp.maximum(acc + x + c_ref[0].astype(cdt), 0.0) * mask

    y = residual_block(x, a1_ref, b1_ref, w1_ref, c1_ref)
    y = residual_block(y, a2_ref, b2_ref, w2_ref, c2_ref)
    # Linear(245, C): (TB, LP) @ (LP, CP) on the MXU, f32 accumulation.
    out_ref[...] = (jnp.dot(y, wl_ref[...], preferred_element_type=jnp.float32)
                    + bl_ref[...])


def fold_block_params(key):
    """Deterministically create one block's params and fold conv+BN (eval mode)."""
    k = jax.random.split(key, 10)
    w1  = 0.5 * jax.random.normal(k[0], (HIDDEN_CH,), jnp.float32)        # Conv1d(1,4,1).weight[:,0,0]
    bi1 = 0.1 * jax.random.normal(k[1], (HIDDEN_CH,), jnp.float32)        # Conv1d(1,4,1).bias
    g1  = 1.0 + 0.1 * jax.random.normal(k[2], (HIDDEN_CH,), jnp.float32)  # BN1 gamma
    be1 = 0.1 * jax.random.normal(k[3], (HIDDEN_CH,), jnp.float32)        # BN1 beta
    mu1 = 0.1 * jax.random.normal(k[4], (HIDDEN_CH,), jnp.float32)        # BN1 running_mean
    v1  = 1.0 + 0.1 * jnp.abs(jax.random.normal(k[5], (HIDDEN_CH,), jnp.float32))  # BN1 running_var
    w2  = 0.3 * jax.random.normal(k[6], (HIDDEN_CH, 3), jnp.float32)      # Conv1d(4,1,3).weight[0]
    bi2 = 0.1 * jax.random.normal(k[7], (), jnp.float32)                  # Conv1d(4,1,3).bias
    g2  = 1.0 + 0.1 * jax.random.normal(k[8], (), jnp.float32)            # BN2 gamma
    be2 = 0.1 * jax.random.normal(k[9], (), jnp.float32)                  # BN2 beta
    mu2 = jnp.float32(0.0)
    v2  = jnp.float32(1.0)

    s1 = g1 / jnp.sqrt(v1 + BN_EPS)
    t1 = be1 - s1 * mu1
    s2 = g2 / jnp.sqrt(v2 + BN_EPS)
    t2 = be2 - s2 * mu2

    a = (s1 * w1).astype(jnp.float32)                         # folded k=1 conv weight
    b = (s1 * bi1 + t1).astype(jnp.float32)                   # folded k=1 conv bias (per-channel)
    w2f = (s2 * w2).astype(jnp.float32)                       # k=3 conv taps with BN2 scale
    c_const = jnp.reshape(s2 * bi2 + t2, (1,)).astype(jnp.float32)
    return a, b, c_const, w2f


def _pick_tiling(n, tb_max):
    """Minimal-padding batch tiling with >= 2 grid steps when n > 8 (v7x dual-TC)."""
    min_steps = 2 if n > 8 else 1
    k_steps = max(min_steps, -(-n // tb_max))           # ceil(n / tb_max)
    tb_eff = _round_up(-(-n // k_steps), 8)             # rows per grid step
    n_pad = k_steps * tb_eff
    return k_steps, tb_eff, n_pad


def convnet_pallas(x, a1, b1, w1, c1, a2, b2, w2, c2, wl, bl,
                   num_classes=NUM_CLASSES, tb=512, compute_dtype=None):
    """x is NCL = (N, 1, L) like PyTorch; returns (N, num_classes) f32 logits."""
    if compute_dtype is None:
        compute_dtype = _select_compute_dtype()

    n = x.shape[0]
    x2d = x.reshape(n, L).astype(jnp.float32)

    cp = max(128, _round_up(num_classes, 128))           # lane-dense output width
    k_steps, tb_eff, n_pad = _pick_tiling(n, tb)

    # Zero-padded, compute-dtype slabs.  Pad lanes of x / bias rows / wl rows are
    # zero so padding never leaks into valid lanes (see invariants at top of file).
    x_p = jnp.zeros((n_pad, LP), compute_dtype).at[:n, :L].set(x2d.astype(compute_dtype))
    wl_p = jnp.zeros((LP, cp), compute_dtype).at[:L, :num_classes].set(
        wl.astype(compute_dtype))
    bl_p = jnp.zeros((1, cp), jnp.float32).at[:, :num_classes].set(
        bl.reshape(1, num_classes).astype(jnp.float32))
    mask = jnp.zeros((1, LP), compute_dtype).at[:, :L].set(
        jnp.ones((1, L), compute_dtype))
    b1_lp = jnp.zeros((HIDDEN_CH, LP), compute_dtype).at[:, :L].set(
        jnp.broadcast_to(b1.astype(compute_dtype)[:, None], (HIDDEN_CH, L)))
    b2_lp = jnp.zeros((HIDDEN_CH, LP), compute_dtype).at[:, :L].set(
        jnp.broadcast_to(b2.astype(compute_dtype)[:, None], (HIDDEN_CH, L)))

    # SMEM scalars stay f32 (cast to the compute dtype inside the kernel).
    a1f, w1f, c1f = a1.astype(jnp.float32), w1.astype(jnp.float32), c1.astype(jnp.float32)
    a2f, w2f, c2f = a2.astype(jnp.float32), w2.astype(jnp.float32), c2.astype(jnp.float32)

    smem = lambda: pl.BlockSpec(memory_space=pltpu.MemorySpace.SMEM)
    resident = lambda shape: pl.BlockSpec(shape, lambda i: (0, 0))

    out = pl.pallas_call(
        convnet_kernel,
        out_shape=jax.ShapeDtypeStruct((n_pad, cp), jnp.float32),
        grid=(k_steps,),
        in_specs=[pl.BlockSpec((tb_eff, LP), lambda i: (i, 0)),   # x tile (pipelined)
                  smem(), resident((HIDDEN_CH, LP)), smem(), smem(),   # block 1
                  smem(), resident((HIDDEN_CH, LP)), smem(), smem(),   # block 2
                  resident((1, LP)),                                   # pad-lane mask
                  resident((LP, cp)),                                  # linear W (VMEM-resident)
                  resident((1, cp))],                                  # linear b (VMEM-resident)
        out_specs=pl.BlockSpec((tb_eff, cp), lambda i: (i, 0)),
        compiler_params=pltpu.CompilerParams(
            dimension_semantics=("parallel",)),
    )(x_p, a1f, b1_lp, w1f, c1f, a2f, b2_lp, w2f, c2f, mask, wl_p, bl_p)
    return out[:n, :num_classes]


# ----------------------- pure-JAX reference (for checking) -----------------------
def _block_reference(x2d, a, b, w2f, c0):
    h = jnp.maximum(a[:, None, None] * x2d[None, :, :] + b[:, None, None], 0.0)  # (4, N, L)
    hp = jnp.pad(h, ((0, 0), (0, 0), (1, 1)))
    conv = (w2f[:, 0][:, None, None] * hp[:, :, 0:L]
            + w2f[:, 1][:, None, None] * hp[:, :, 1:L + 1]
            + w2f[:, 2][:, None, None] * hp[:, :, 2:L + 2]).sum(axis=0) + c0
    return jnp.maximum(conv + x2d, 0.0)


def convnet_reference(x2d, a1, b1, w2f1, c1, a2, b2, w2f2, c2, wl, bl):
    y = _block_reference(x2d, a1, b1, w2f1, c1[0])
    y = _block_reference(y, a2, b2, w2f2, c2[0])
    return y @ wl + bl


if __name__ == "__main__":
    key = jax.random.PRNGKey(0)
    kx, kp1, kp2, kw, kb = jax.random.split(key, 5)

    # input: (batch=2, channels=1, length=245), matching the PyTorch module
    x = jax.random.normal(kx, (2, 1, L), jnp.float32)

    a1, b1, c1, w2f1 = fold_block_params(kp1)
    a2, b2, c2, w2f2 = fold_block_params(kp2)
    wl = 0.05 * jax.random.normal(kw, (L, NUM_CLASSES), jnp.float32)   # Linear(245, C).weight.T
    bl = 0.1 * jax.random.normal(kb, (1, NUM_CLASSES), jnp.float32)    # Linear(245, C).bias

    cdt = _select_compute_dtype()
    logits = jax.block_until_ready(
        convnet_pallas(x, a1, b1, w2f1, c1, a2, b2, w2f2, c2, wl, bl,
                       compute_dtype=cdt))

    ref = convnet_reference(x.reshape(2, L).astype(jnp.float32),
                            a1, b1, w2f1, c1, a2, b2, w2f2, c2, wl, bl)
    tol = 2e-3 if cdt == jnp.float32 else 5e-2   # bf16 activations need looser tolerance
    np.testing.assert_allclose(np.asarray(logits), np.asarray(ref), rtol=tol, atol=tol)
    print("KERNEL_OK")
</pallas_src>

<mosaic_0001>
module attributes {stable_mosaic.version = 11 : i64} {
  func.func @convnet_kernel(%arg0: i32, %arg1: memref<8x256xf32, #tpu.memory_space<vmem>>, %arg2: memref<4xf32, #tpu.memory_space<smem>>, %arg3: memref<4x256xf32, #tpu.memory_space<vmem>>, %arg4: memref<4x3xf32, #tpu.memory_space<smem>>, %arg5: memref<1xf32, #tpu.memory_space<smem>>, %arg6: memref<4xf32, #tpu.memory_space<smem>>, %arg7: memref<4x256xf32, #tpu.memory_space<vmem>>, %arg8: memref<4x3xf32, #tpu.memory_space<smem>>, %arg9: memref<1xf32, #tpu.memory_space<smem>>, %arg10: memref<1x256xf32, #tpu.memory_space<vmem>>, %arg11: memref<256x128xf32, #tpu.memory_space<vmem>>, %arg12: memref<1x128xf32, #tpu.memory_space<vmem>>, %arg13: memref<8x128xf32, #tpu.memory_space<vmem>>) attributes {dimension_semantics = [#tpu.dimension_semantics<parallel>], iteration_bounds = array<i64: 1>, scalar_prefetch = 0 : i64, scratch_operands = 0 : i64, tpu.core_type = #tpu.core_type<tc>, window_params = [{transform_indices = @transform_0, window_bounds = array<i64: 8, 256>}, {transform_indices = @transform_1, window_bounds = array<i64: 4>}, {pipeline_mode = #tpu.pipeline_mode<synchronous>, transform_indices = @transform_2, window_bounds = array<i64: 4, 256>}, {transform_indices = @transform_3, window_bounds = array<i64: 4, 3>}, {transform_indices = @transform_4, window_bounds = array<i64: 1>}, {transform_indices = @transform_5, window_bounds = array<i64: 4>}, {pipeline_mode = #tpu.pipeline_mode<synchronous>, transform_indices = @transform_6, window_bounds = array<i64: 4, 256>}, {transform_indices = @transform_7, window_bounds = array<i64: 4, 3>}, {transform_indices = @transform_8, window_bounds = array<i64: 1>}, {pipeline_mode = #tpu.pipeline_mode<synchronous>, transform_indices = @transform_9, window_bounds = array<i64: 1, 256>}, {pipeline_mode = #tpu.pipeline_mode<synchronous>, transform_indices = @transform_10, window_bounds = array<i64: 256, 128>}, {pipeline_mode = #tpu.pipeline_mode<synchronous>, transform_indices = @transform_11, window_bounds = array<i64: 1, 128>}, {transform_indices = @transform_12, window_bounds = array<i64: 8, 128>}]} {
    %c0 = arith.constant 0 : index
    %c0_0 = arith.constant 0 : index
    %0 = vector.load %arg1[%c0, %c0_0] : memref<8x256xf32, #tpu.memory_space<vmem>>, vector<8x256xf32>
    %c0_1 = arith.constant 0 : index
    %c0_2 = arith.constant 0 : index
    %1 = vector.load %arg10[%c0_1, %c0_2] : memref<1x256xf32, #tpu.memory_space<vmem>>, vector<1x256xf32>
    %c0_3 = arith.constant 0 : index
    %2 = memref.load %arg2[%c0_3] : memref<4xf32, #tpu.memory_space<smem>>
    %3 = vector.broadcast %2 : f32 to vector<8x256xf32>
    %4 = arith.mulf %3, %0 : vector<8x256xf32>
    %c0_4 = arith.constant 0 : index
    %c0_5 = arith.constant 0 : index
    %5 = vector.load %arg3[%c0_4, %c0_5] : memref<4x256xf32, #tpu.memory_space<vmem>>, vector<1x256xf32>
    %6 = vector.shape_cast %5 : vector<1x256xf32> to vector<256xf32>
    %7 = vector.shape_cast %6 : vector<256xf32> to vector<1x256xf32>
    %8 = vector.broadcast %7 : vector<1x256xf32> to vector<8x256xf32>
    %9 = arith.addf %4, %8 : vector<8x256xf32>
    %cst = arith.constant 0.000000e+00 : f32
    %10 = vector.broadcast %cst : f32 to vector<8x256xf32>
    %11 = arith.maximumf %9, %10 : vector<8x256xf32>
    %c0_6 = arith.constant 0 : index
    %c0_7 = arith.constant 0 : index
    %12 = memref.load %arg4[%c0_6, %c0_7] : memref<4x3xf32, #tpu.memory_space<smem>>
    %13 = vector.broadcast %12 : f32 to vector<8x256xf32>
    %14 = arith.mulf %13, %11 : vector<8x256xf32>
    %c0_8 = arith.constant 0 : index
    %c1 = arith.constant 1 : index
    %15 = memref.load %arg4[%c0_8, %c1] : memref<4x3xf32, #tpu.memory_space<smem>>
    %16 = vector.broadcast %15 : f32 to vector<8x256xf32>
    %17 = arith.mulf %16, %11 : vector<8x256xf32>
    %c0_9 = arith.constant 0 : index
    %c2 = arith.constant 2 : index
    %18 = memref.load %arg4[%c0_9, %c2] : memref<4x3xf32, #tpu.memory_space<smem>>
    %19 = vector.broadcast %18 : f32 to vector<8x256xf32>
    %20 = arith.mulf %19, %11 : vector<8x256xf32>
    %c1_10 = arith.constant 1 : index
    %21 = memref.load %arg2[%c1_10] : memref<4xf32, #tpu.memory_space<smem>>
    %22 = vector.broadcast %21 : f32 to vector<8x256xf32>
    %23 = arith.mulf %22, %0 : vector<8x256xf32>
    %c1_11 = arith.constant 1 : index
    %c0_12 = arith.constant 0 : index
    %24 = vector.load %arg3[%c1_11, %c0_12] : memref<4x256xf32, #tpu.memory_space<vmem>>, vector<1x256xf32>
    %25 = vector.shape_cast %24 : vector<1x256xf32> to vector<256xf32>
    %26 = vector.shape_cast %25 : vector<256xf32> to vector<1x256xf32>
    %27 = vector.broadcast %26 : vector<1x256xf32> to vector<8x256xf32>
    %28 = arith.addf %23, %27 : vector<8x256xf32>
    %cst_13 = arith.constant 0.000000e+00 : f32
    %29 = vector.broadcast %cst_13 : f32 to vector<8x256xf32>
    %30 = arith.maximumf %28, %29 : vector<8x256xf32>
    %c1_14 = arith.constant 1 : index
    %c0_15 = arith.constant 0 : index
    %31 = memref.load %arg4[%c1_14, %c0_15] : memref<4x3xf32, #tpu.memory_space<smem>>
    %32 = vector.broadcast %31 : f32 to vector<8x256xf32>
    %33 = arith.mulf %32, %30 : vector<8x256xf32>
    %c1_16 = arith.constant 1 : index
    %c1_17 = arith.constant 1 : index
    %34 = memref.load %arg4[%c1_16, %c1_17] : memref<4x3xf32, #tpu.memory_space<smem>>
    %35 = vector.broadcast %34 : f32 to vector<8x256xf32>
    %36 = arith.mulf %35, %30 : vector<8x256xf32>
    %c1_18 = arith.constant 1 : index
    %c2_19 = arith.constant 2 : index
    %37 = memref.load %arg4[%c1_18, %c2_19] : memref<4x3xf32, #tpu.memory_space<smem>>
    %38 = vector.broadcast %37 : f32 to vector<8x256xf32>
    %39 = arith.mulf %38, %30 : vector<8x256xf32>
    %40 = arith.addf %14, %33 : vector<8x256xf32>
    %41 = arith.addf %17, %36 : vector<8x256xf32>
    %42 = arith.addf %20, %39 : vector<8x256xf32>
    %c2_20 = arith.constant 2 : index
    %43 = memref.load %arg2[%c2_20] : memref<4xf32, #tpu.memory_space<smem>>
    %44 = vector.broadcast %43 : f32 to vector<8x256xf32>
    %45 = arith.mulf %44, %0 : vector<8x256xf32>
    %c2_21 = arith.constant 2 : index
    %c0_22 = arith.constant 0 : index
    %46 = vector.load %arg3[%c2_21, %c0_22] : memref<4x256xf32, #tpu.memory_space<vmem>>, vector<1x256xf32>
    %47 = vector.shape_cast %46 : vector<1x256xf32> to vector<256xf32>
    %48 = vector.shape_cast %47 : vector<256xf32> to vector<1x256xf32>
    %49 = vector.broadcast %48 : vector<1x256xf32> to vector<8x256xf32>
    %50 = arith.addf %45, %49 : vector<8x256xf32>
    %cst_23 = arith.constant 0.000000e+00 : f32
    %51 = vector.broadcast %cst_23 : f32 to vector<8x256xf32>
    %52 = arith.maximumf %50, %51 : vector<8x256xf32>
    %c2_24 = arith.constant 2 : index
    %c0_25 = arith.constant 0 : index
    %53 = memref.load %arg4[%c2_24, %c0_25] : memref<4x3xf32, #tpu.memory_space<smem>>
    %54 = vector.broadcast %53 : f32 to vector<8x256xf32>
    %55 = arith.mulf %54, %52 : vector<8x256xf32>
    %c2_26 = arith.constant 2 : index
    %c1_27 = arith.constant 1 : index
    %56 = memref.load %arg4[%c2_26, %c1_27] : memref<4x3xf32, #tpu.memory_space<smem>>
    %57 = vector.broadcast %56 : f32 to vector<8x256xf32>
    %58 = arith.mulf %57, %52 : vector<8x256xf32>
    %c2_28 = arith.constant 2 : index
    %c2_29 = arith.constant 2 : index
    %59 = memref.load %arg4[%c2_28, %c2_29] : memref<4x3xf32, #tpu.memory_space<smem>>
    %60 = vector.broadcast %59 : f32 to vector<8x256xf32>
    %61 = arith.mulf %60, %52 : vector<8x256xf32>
    %62 = arith.addf %40, %55 : vector<8x256xf32>
    %63 = arith.addf %41, %58 : vector<8x256xf32>
    %64 = arith.addf %42, %61 : vector<8x256xf32>
    %c3 = arith.constant 3 : index
    %65 = memref.load %arg2[%c3] : memref<4xf32, #tpu.memory_space<smem>>
    %66 = vector.broadcast %65 : f32 to vector<8x256xf32>
    %67 = arith.mulf %66, %0 : vector<8x256xf32>
    %c3_30 = arith.constant 3 : index
    %c0_31 = arith.constant 0 : index
    %68 = vector.load %arg3[%c3_30, %c0_31] : memref<4x256xf32, #tpu.memory_space<vmem>>, vector<1x256xf32>
    %69 = vector.shape_cast %68 : vector<1x256xf32> to vector<256xf32>
    %70 = vector.shape_cast %69 : vector<256xf32> to vector<1x256xf32>
    %71 = vector.broadcast %70 : vector<1x256xf32> to vector<8x256xf32>
    %72 = arith.addf %67, %71 : vector<8x256xf32>
    %cst_32 = arith.constant 0.000000e+00 : f32
    %73 = vector.broadcast %cst_32 : f32 to vector<8x256xf32>
    %74 = arith.maximumf %72, %73 : vector<8x256xf32>
    %c3_33 = arith.constant 3 : index
    %c0_34 = arith.constant 0 : index
    %75 = memref.load %arg4[%c3_33, %c0_34] : memref<4x3xf32, #tpu.memory_space<smem>>
    %76 = vector.broadcast %75 : f32 to vector<8x256xf32>
    %77 = arith.mulf %76, %74 : vector<8x256xf32>
    %c3_35 = arith.constant 3 : index
    %c1_36 = arith.constant 1 : index
    %78 = memref.load %arg4[%c3_35, %c1_36] : memref<4x3xf32, #tpu.memory_space<smem>>
    %79 = vector.broadcast %78 : f32 to vector<8x256xf32>
    %80 = arith.mulf %79, %74 : vector<8x256xf32>
    %c3_37 = arith.constant 3 : index
    %c2_38 = arith.constant 2 : index
    %81 = memref.load %arg4[%c3_37, %c2_38] : memref<4x3xf32, #tpu.memory_space<smem>>
    %82 = vector.broadcast %81 : f32 to vector<8x256xf32>
    %83 = arith.mulf %82, %74 : vector<8x256xf32>
    %84 = arith.addf %62, %77 : vector<8x256xf32>
    %85 = arith.addf %63, %80 : vector<8x256xf32>
    %86 = arith.addf %64, %83 : vector<8x256xf32>
    %c1_i32 = arith.constant 1 : i32
    %87 = tpu.dynamic_rotate %84 by %c1_i32 dim 1 : vector<8x256xf32>, i32 -> vector<8x256xf32>
    %88 = arith.addf %87, %85 : vector<8x256xf32>
    %c255_i32 = arith.constant 255 : i32
    %89 = tpu.dynamic_rotate %86 by %c255_i32 dim 1 : vector<8x256xf32>, i32 -> vector<8x256xf32>
    %90 = arith.addf %88, %89 : vector<8x256xf32>
    %91 = arith.addf %90, %0 : vector<8x256xf32>
    %c0_39 = arith.constant 0 : index
    %92 = memref.load %arg5[%c0_39] : memref<1xf32, #tpu.memory_space<smem>>
    %93 = vector.broadcast %92 : f32 to vector<8x256xf32>
    %94 = arith.addf %91, %93 : vector<8x256xf32>
    %cst_40 = arith.constant 0.000000e+00 : f32
    %95 = vector.broadcast %cst_40 : f32 to vector<8x256xf32>
    %96 = arith.maximumf %94, %95 : vector<8x256xf32>
    %97 = vector.broadcast %1 : vector<1x256xf32> to vector<8x256xf32>
    %98 = arith.mulf %96, %97 : vector<8x256xf32>
    %c0_41 = arith.constant 0 : index
    %99 = memref.load %arg6[%c0_41] : memref<4xf32, #tpu.memory_space<smem>>
    %100 = vector.broadcast %99 : f32 to vector<8x256xf32>
    %101 = arith.mulf %100, %98 : vector<8x256xf32>
    %c0_42 = arith.constant 0 : index
    %c0_43 = arith.constant 0 : index
    %102 = vector.load %arg7[%c0_42, %c0_43] : memref<4x256xf32, #tpu.memory_space<vmem>>, vector<1x256xf32>
    %103 = vector.shape_cast %102 : vector<1x256xf32> to vector<256xf32>
    %104 = vector.shape_cast %103 : vector<256xf32> to vector<1x256xf32>
    %105 = vector.broadcast %104 : vector<1x256xf32> to vector<8x256xf32>
    %106 = arith.addf %101, %105 : vector<8x256xf32>
    %cst_44 = arith.constant 0.000000e+00 : f32
    %107 = vector.broadcast %cst_44 : f32 to vector<8x256xf32>
    %108 = arith.maximumf %106, %107 : vector<8x256xf32>
    %c0_45 = arith.constant 0 : index
    %c0_46 = arith.constant 0 : index
    %109 = memref.load %arg8[%c0_45, %c0_46] : memref<4x3xf32, #tpu.memory_space<smem>>
    %110 = vector.broadcast %109 : f32 to vector<8x256xf32>
    %111 = arith.mulf %110, %108 : vector<8x256xf32>
    %c0_47 = arith.constant 0 : index
    %c1_48 = arith.constant 1 : index
    %112 = memref.load %arg8[%c0_47, %c1_48] : memref<4x3xf32, #tpu.memory_space<smem>>
    %113 = vector.broadcast %112 : f32 to vector<8x256xf32>
    %114 = arith.mulf %113, %108 : vector<8x256xf32>
    %c0_49 = arith.constant 0 : index
    %c2_50 = arith.constant 2 : index
    %115 = memref.load %arg8[%c0_49, %c2_50] : memref<4x3xf32, #tpu.memory_space<smem>>
    %116 = vector.broadcast %115 : f32 to vector<8x256xf32>
    %117 = arith.mulf %116, %108 : vector<8x256xf32>
    %c1_51 = arith.constant 1 : index
    %118 = memref.load %arg6[%c1_51] : memref<4xf32, #tpu.memory_space<smem>>
    %119 = vector.broadcast %118 : f32 to vector<8x256xf32>
    %120 = arith.mulf %119, %98 : vector<8x256xf32>
    %c1_52 = arith.constant 1 : index
    %c0_53 = arith.constant 0 : index
    %121 = vector.load %arg7[%c1_52, %c0_53] : memref<4x256xf32, #tpu.memory_space<vmem>>, vector<1x256xf32>
    %122 = vector.shape_cast %121 : vector<1x256xf32> to vector<256xf32>
    %123 = vector.shape_cast %122 : vector<256xf32> to vector<1x256xf32>
    %124 = vector.broadcast %123 : vector<1x256xf32> to vector<8x256xf32>
    %125 = arith.addf %120, %124 : vector<8x256xf32>
    %cst_54 = arith.constant 0.000000e+00 : f32
    %126 = vector.broadcast %cst_54 : f32 to vector<8x256xf32>
    %127 = arith.maximumf %125, %126 : vector<8x256xf32>
    %c1_55 = arith.constant 1 : index
    %c0_56 = arith.constant 0 : index
    %128 = memref.load %arg8[%c1_55, %c0_56] : memref<4x3xf32, #tpu.memory_space<smem>>
    %129 = vector.broadcast %128 : f32 to vector<8x256xf32>
    %130 = arith.mulf %129, %127 : vector<8x256xf32>
    %c1_57 = arith.constant 1 : index
    %c1_58 = arith.constant 1 : index
    %131 = memref.load %arg8[%c1_57, %c1_58] : memref<4x3xf32, #tpu.memory_space<smem>>
    %132 = vector.broadcast %131 : f32 to vector<8x256xf32>
    %133 = arith.mulf %132, %127 : vector<8x256xf32>
    %c1_59 = arith.constant 1 : index
    %c2_60 = arith.constant 2 : index
    %134 = memref.load %arg8[%c1_59, %c2_60] : memref<4x3xf32, #tpu.memory_space<smem>>
    %135 = vector.broadcast %134 : f32 to vector<8x256xf32>
    %136 = arith.mulf %135, %127 : vector<8x256xf32>
    %137 = arith.addf %111, %130 : vector<8x256xf32>
    %138 = arith.addf %114, %133 : vector<8x256xf32>
    %139 = arith.addf %117, %136 : vector<8x256xf32>
    %c2_61 = arith.constant 2 : index
    %140 = memref.load %arg6[%c2_61] : memref<4xf32, #tpu.memory_space<smem>>
    %141 = vector.broadcast %140 : f32 to vector<8x256xf32>
    %142 = arith.mulf %141, %98 : vector<8x256xf32>
    %c2_62 = arith.constant 2 : index
    %c0_63 = arith.constant 0 : index
    %143 = vector.load %arg7[%c2_62, %c0_63] : memref<4x256xf32, #tpu.memory_space<vmem>>, vector<1x256xf32>
    %144 = vector.shape_cast %143 : vector<1x256xf32> to vector<256xf32>
    %145 = vector.shape_cast %144 : vector<256xf32> to vector<1x256xf32>
    %146 = vector.broadcast %145 : vector<1x256xf32> to vector<8x256xf32>
    %147 = arith.addf %142, %146 : vector<8x256xf32>
    %cst_64 = arith.constant 0.000000e+00 : f32
    %148 = vector.broadcast %cst_64 : f32 to vector<8x256xf32>
    %149 = arith.maximumf %147, %148 : vector<8x256xf32>
    %c2_65 = arith.constant 2 : index
    %c0_66 = arith.constant 0 : index
    %150 = memref.load %arg8[%c2_65, %c0_66] : memref<4x3xf32, #tpu.memory_space<smem>>
    %151 = vector.broadcast %150 : f32 to vector<8x256xf32>
    %152 = arith.mulf %151, %149 : vector<8x256xf32>
    %c2_67 = arith.constant 2 : index
    %c1_68 = arith.constant 1 : index
    %153 = memref.load %arg8[%c2_67, %c1_68] : memref<4x3xf32, #tpu.memory_space<smem>>
    %154 = vector.broadcast %153 : f32 to vector<8x256xf32>
    %155 = arith.mulf %154, %149 : vector<8x256xf32>
    %c2_69 = arith.constant 2 : index
    %c2_70 = arith.constant 2 : index
    %156 = memref.load %arg8[%c2_69, %c2_70] : memref<4x3xf32, #tpu.memory_space<smem>>
    %157 = vector.broadcast %156 : f32 to vector<8x256xf32>
    %158 = arith.mulf %157, %149 : vector<8x256xf32>
    %159 = arith.addf %137, %152 : vector<8x256xf32>
    %160 = arith.addf %138, %155 : vector<8x256xf32>
    %161 = arith.addf %139, %158 : vector<8x256xf32>
    %c3_71 = arith.constant 3 : index
    %162 = memref.load %arg6[%c3_71] : memref<4xf32, #tpu.memory_space<smem>>
    %163 = vector.broadcast %162 : f32 to vector<8x256xf32>
    %164 = arith.mulf %163, %98 : vector<8x256xf32>
    %c3_72 = arith.constant 3 : index
    %c0_73 = arith.constant 0 : index
    %165 = vector.load %arg7[%c3_72, %c0_73] : memref<4x256xf32, #tpu.memory_space<vmem>>, vector<1x256xf32>
    %166 = vector.shape_cast %165 : vector<1x256xf32> to vector<256xf32>
    %167 = vector.shape_cast %166 : vector<256xf32> to vector<1x256xf32>
    %168 = vector.broadcast %167 : vector<1x256xf32> to vector<8x256xf32>
    %169 = arith.addf %164, %168 : vector<8x256xf32>
    %cst_74 = arith.constant 0.000000e+00 : f32
    %170 = vector.broadcast %cst_74 : f32 to vector<8x256xf32>
    %171 = arith.maximumf %169, %170 : vector<8x256xf32>
    %c3_75 = arith.constant 3 : index
    %c0_76 = arith.constant 0 : index
    %172 = memref.load %arg8[%c3_75, %c0_76] : memref<4x3xf32, #tpu.memory_space<smem>>
    %173 = vector.broadcast %172 : f32 to vector<8x256xf32>
    %174 = arith.mulf %173, %171 : vector<8x256xf32>
    %c3_77 = arith.constant 3 : index
    %c1_78 = arith.constant 1 : index
    %175 = memref.load %arg8[%c3_77, %c1_78] : memref<4x3xf32, #tpu.memory_space<smem>>
    %176 = vector.broadcast %175 : f32 to vector<8x256xf32>
    %177 = arith.mulf %176, %171 : vector<8x256xf32>
    %c3_79 = arith.constant 3 : index
    %c2_80 = arith.constant 2 : index
    %178 = memref.load %arg8[%c3_79, %c2_80] : memref<4x3xf32, #tpu.memory_space<smem>>
    %179 = vector.broadcast %178 : f32 to vector<8x256xf32>
    %180 = arith.mulf %179, %171 : vector<8x256xf32>
    %181 = arith.addf %159, %174 : vector<8x256xf32>
    %182 = arith.addf %160, %177 : vector<8x256xf32>
    %183 = arith.addf %161, %180 : vector<8x256xf32>
    %c1_i32_81 = arith.constant 1 : i32
    %184 = tpu.dynamic_rotate %181 by %c1_i32_81 dim 1 : vector<8x256xf32>, i32 -> vector<8x256xf32>
    %185 = arith.addf %184, %182 : vector<8x256xf32>
    %c255_i32_82 = arith.constant 255 : i32
    %186 = tpu.dynamic_rotate %183 by %c255_i32_82 dim 1 : vector<8x256xf32>, i32 -> vector<8x256xf32>
    %187 = arith.addf %185, %186 : vector<8x256xf32>
    %188 = arith.addf %187, %98 : vector<8x256xf32>
    %c0_83 = arith.constant 0 : index
    %189 = memref.load %arg9[%c0_83] : memref<1xf32, #tpu.memory_space<smem>>
    %190 = vector.broadcast %189 : f32 to vector<8x256xf32>
    %191 = arith.addf %188, %190 : vector<8x256xf32>
    %cst_84 = arith.constant 0.000000e+00 : f32
    %192 = vector.broadcast %cst_84 : f32 to vector<8x256xf32>
    %193 = arith.maximumf %191, %192 : vector<8x256xf32>
    %194 = vector.broadcast %1 : vector<1x256xf32> to vector<8x256xf32>
    %195 = arith.mulf %193, %194 : vector<8x256xf32>
    %c0_85 = arith.constant 0 : index
    %c0_86 = arith.constant 0 : index
    %196 = vector.load %arg11[%c0_85, %c0_86] : memref<256x128xf32, #tpu.memory_space<vmem>>, vector<256x128xf32>
    %cst_87 = arith.constant dense<0.000000e+00> : vector<8x128xf32>
    %197 = tpu.matmul %195, %196, %cst_87 {dimension_numbers = #tpu.dot_dimension_numbers<[1], [0], [0], [1], [0, 0, 1, 1], [], []>} : vector<8x256xf32>, vector<256x128xf32>, vector<8x128xf32> -> vector<8x128xf32>
    %c0_88 = arith.constant 0 : index
    %c0_89 = arith.constant 0 : index
    %198 = vector.load %arg12[%c0_88, %c0_89] : memref<1x128xf32, #tpu.memory_space<vmem>>, vector<1x128xf32>
    %199 = vector.broadcast %198 : vector<1x128xf32> to vector<8x128xf32>
    %200 = arith.addf %197, %199 : vector<8x128xf32>
    %c0_90 = arith.constant 0 : index
    %c0_91 = arith.constant 0 : index
    %201 = vector.load %arg13[%c0_90, %c0_91] : memref<8x128xf32, #tpu.memory_space<vmem>>, vector<8x128xf32>
    tpu.vector_store %arg13[%c0_90, %c0_91], %200 {strides = array<i32>} : memref<8x128xf32, #tpu.memory_space<vmem>>, vector<8x128xf32>,
    return
  }
  func.func @transform_0(%arg0: i32) -> (i32, i32) {
    %c0_i32 = arith.constant 0 : i32
    %c0_i32_0 = arith.constant 0 : i32
    return %arg0, %c0_i32 : i32, i32
  }
  func.func @transform_1(%arg0: i32) -> i32 {
    %c0_i32 = arith.constant 0 : i32
    %c0_i32_0 = arith.constant 0 : i32
    return %c0_i32 : i32
  }
  func.func @transform_2(%arg0: i32) -> (i32, i32) {
    %c0_i32 = arith.constant 0 : i32
    %c0_i32_0 = arith.constant 0 : i32
    %c0_i32_1 = arith.constant 0 : i32
    return %c0_i32, %c0_i32_0 : i32, i32
  }
  func.func @transform_3(%arg0: i32) -> (i32, i32) {
    %c0_i32 = arith.constant 0 : i32
    %c0_i32_0 = arith.constant 0 : i32
    %c0_i32_1 = arith.constant 0 : i32
    return %c0_i32, %c0_i32_0 : i32, i32
  }
  func.func @transform_4(%arg0: i32) -> i32 {
    %c0_i32 = arith.constant 0 : i32
    %c0_i32_0 = arith.constant 0 : i32
    return %c0_i32 : i32
  }
  func.func @transform_5(%arg0: i32) -> i32 {
    %c0_i32 = arith.constant 0 : i32
    %c0_i32_0 = arith.constant 0 : i32
    return %c0_i32 : i32
  }
  func.func @transform_6(%arg0: i32) -> (i32, i32) {
    %c0_i32 = arith.constant 0 : i32
    %c0_i32_0 = arith.constant 0 : i32
    %c0_i32_1 = arith.constant 0 : i32
    return %c0_i32, %c0_i32_0 : i32, i32
  }
  func.func @transform_7(%arg0: i32) -> (i32, i32) {
    %c0_i32 = arith.constant 0 : i32
    %c0_i32_0 = arith.constant 0 : i32
    %c0_i32_1 = arith.constant 0 : i32
    return %c0_i32, %c0_i32_0 : i32, i32
  }
  func.func @transform_8(%arg0: i32) -> i32 {
    %c0_i32 = arith.constant 0 : i32
    %c0_i32_0 = arith.constant 0 : i32
    return %c0_i32 : i32
  }
  func.func @transform_9(%arg0: i32) -> (i32, i32) {
    %c0_i32 = arith.constant 0 : i32
    %c0_i32_0 = arith.constant 0 : i32
    %c0_i32_1 = arith.constant 0 : i32
    return %c0_i32, %c0_i32_0 : i32, i32
  }
  func.func @transform_10(%arg0: i32) -> (i32, i32) {
    %c0_i32 = arith.constant 0 : i32
    %c0_i32_0 = arith.constant 0 : i32
    %c0_i32_1 = arith.constant 0 : i32
    return %c0_i32, %c0_i32_0 : i32, i32
  }
  func.func @transform_11(%arg0: i32) -> (i32, i32) {
    %c0_i32 = arith.constant 0 : i32
    %c0_i32_0 = arith.constant 0 : i32
    %c0_i32_1 = arith.constant 0 : i32
    return %c0_i32, %c0_i32_0 : i32, i32
  }
  func.func @transform_12(%arg0: i32) -> (i32, i32) {
    %c0_i32 = arith.constant 0 : i32
    %c0_i32_0 = arith.constant 0 : i32
    return %arg0, %c0_i32 : i32, i32
  }
}

</mosaic_0001>

<llo_original>
// kernel: tpu_custom_call.1
$region0: #{tpu_custom_call.1}
  #allocation0 [shape = 'u32[]', space=smem, size = 0x4, offset = 0x4, fixed_abs, tag = 'smem constant byte address 0x4 - core index']
  #allocation1 [shape = 'u32[72,128]{1,0:T(1,128)}', space=vmem, size = 0x9000, scoped, tag = 'internal scratch']
  #allocation2 [shape = 'f32[1]{0:T(128)S(6)}', space=smem, size = 0x200, scoped, tag = 'scoped memory for tpu_custom_call.1']
  #allocation3 [shape = 'f32[1]{0:T(128)S(6)}', space=smem, size = 0x200, scoped, tag = 'scoped memory for tpu_custom_call.1']
  %s0 = inlined_call_operand.hbm [shape: f32[8,256], index: 0, kind: input, shape index: {}]
  %s1 = inlined_call_operand.hbm [shape: f32[4], index: 1, kind: input, shape index: {}]
  %s2 = inlined_call_operand.hbm [shape: f32[4,256], index: 2, kind: input, shape index: {}]
  %s3 = inlined_call_operand.hbm [shape: f32[4,3], index: 3, kind: input, shape index: {}]
  %s4 = inlined_call_operand.<no memory space> [shape: f32[1], index: 4, kind: input, shape index: {}]
  %s5 = inlined_call_operand.hbm [shape: f32[4], index: 5, kind: input, shape index: {}]
  %s6 = inlined_call_operand.vmem [shape: f32[4,256], index: 6, kind: input, shape index: {}]
  %s7 = inlined_call_operand.hbm [shape: f32[4,3], index: 7, kind: input, shape index: {}]
  %s8 = inlined_call_operand.<no memory space> [shape: f32[1], index: 8, kind: input, shape index: {}]
  %s9 = inlined_call_operand.vmem [shape: f32[1,256], index: 9, kind: input, shape index: {}]
  %s10 = inlined_call_operand.hbm [shape: f32[256,128], index: 10, kind: input, shape index: {}]
  %s11 = inlined_call_operand.vmem [shape: f32[1,128], index: 11, kind: input, shape index: {}]
  %s12 = inlined_call_operand.hbm [shape: f32[8,128], index: 12, kind: output, shape index: {}]
  %s13 = sld [smem:[#allocation0]]
  $region86: #{tpu_custom_call.1} parent=0
    _
  %s15 = ssub.s32 1, %s13
  %s16 = scalar_select 0, %s15, %s13
  %17 = sst [smem:[#allocation2]] %s4
  %18 = sst [smem:[#allocation3]] %s8
  $region1: #{tpu_custom_call.1} parent=0
    #allocation4 [shape = 'u8[8192]{0}', space=vmem, size = 0x2000, scoped, tag = 'input window, operand 0, single buffered']
    #allocation5 [shape = 's32[1]{0}', space=sflag, size = 0x4, scoped, tag = 'scoped memory for tpu_custom_call.1']
    #allocation6 [shape = 's32[1]{0}', space=sflag, size = 0x4, scoped, tag = 'scoped memory for tpu_custom_call.1']
    #allocation7 [shape = 's32[1]{0}', space=sflag, size = 0x4, scoped, tag = 'scoped memory for tpu_custom_call.1']
    #allocation8 [shape = 'u8[512]{0}', space=smem, size = 0x200, scoped, tag = 'input window, operand 1, single buffered']
    #allocation9 [shape = 'u8[4096]{0}', space=vmem, size = 0x1000, scoped, tag = 'input window, operand 2, single buffered']
    #allocation10 [shape = 's32[1]{0}', space=sflag, size = 0x4, scoped, tag = 'scoped memory for tpu_custom_call.1']
    #allocation11 [shape = 'u8[2048]{0}', space=smem, size = 0x800, scoped, tag = 'input window, operand 3, single buffered']
    #allocation12 [shape = 's32[1]{0}', space=sflag, size = 0x4, scoped, tag = 'scoped memory for tpu_custom_call.1']
    #allocation13 [shape = 'u8[512]{0}', space=smem, size = 0x200, scoped, tag = 'input window, operand 5, single buffered']
    #allocation14 [shape = 'u8[2048]{0}', space=smem, size = 0x800, scoped, tag = 'input window, operand 7, single buffered']
    #allocation15 [shape = 's32[1]{0}', space=sflag, size = 0x4, scoped, tag = 'scoped memory for tpu_custom_call.1']
    #allocation16 [shape = 'u8[131072]{0}', space=vmem, size = 0x20000, scoped, tag = 'input window, operand 10, single buffered']
    #allocation17 [shape = 'u8[4096]{0}', space=vmem, size = 0x1000, scoped, tag = 'output window, operand 0, single buffered']
    %19 = vsyncpa [#allocation5], 0
    %20 = vsyncpa [#allocation7], 0
    %21 = vsyncpa [#allocation10], 0
    %22 = vsyncpa [#allocation12], 0
    %23 = vsyncpa [#allocation15], 0
    %24 = vsyncpa [#allocation6], 0
    // Predicated region
    $region2: #{tpu_custom_call.1} parent=1 // pred_check
      _
    $region3: #{tpu_custom_call.1} parent=1 // pred_check_branch
      %26 = sbr.rel (0) target = $region5
    $region4: #{tpu_custom_call.1} parent=1 // pred_region
      %28 = vsyncadd [#allocation5], 0
      %s30 = sshll.u32 %s0, 4
      %s31 = int_to_ptr.hbm [resolvable:$true] %s30
      %s32 = sshll.u32 [#allocation4], 4
      %s33 = int_to_ptr.vmem [resolvable:$true] %s32
      %35 = dma.hbm_to_vmem [thread:$0]  %s31, 256, %s33, [#allocation5]
    $region5: #{tpu_custom_call.1} parent=1 // pred_fallthru
      _
    // Predicated region
    $region6: #{tpu_custom_call.1} parent=1 // pred_check
      _
    $region7: #{tpu_custom_call.1} parent=1 // pred_check_branch
      %37 = sbr.rel (0) target = $region9
    $region8: #{tpu_custom_call.1} parent=1 // pred_region
      %39 = vsyncadd [#allocation7], 0
      %s41 = sshll.u32 %s1, 4
      %s42 = int_to_ptr.hbm [resolvable:$true] %s41
      %44 = dma.hbm_to_smem %s42, 16, [#allocation8], [#allocation7]
    $region9: #{tpu_custom_call.1} parent=1 // pred_fallthru
      _
    // Predicated region
    $region10: #{tpu_custom_call.1} parent=1 // pred_check
      _
    $region11: #{tpu_custom_call.1} parent=1 // pred_check_branch
      %46 = sbr.rel (0) target = $region13
    $region12: #{tpu_custom_call.1} parent=1 // pred_region
      %48 = vsyncadd [#allocation10], 0
      %s50 = sshll.u32 %s2, 4
      %s51 = int_to_ptr.hbm [resolvable:$true] %s50
      %s52 = sshll.u32 [#allocation9], 4
      %s53 = int_to_ptr.vmem [resolvable:$true] %s52
      %55 = dma.hbm_to_vmem [thread:$0]  %s51, 128, %s53, [#allocation10]
    $region13: #{tpu_custom_call.1} parent=1 // pred_fallthru
      _
    // Predicated region
    $region14: #{tpu_custom_call.1} parent=1 // pred_check
      _
    $region15: #{tpu_custom_call.1} parent=1 // pred_check_branch
      %57 = sbr.rel (0) target = $region17
    $region16: #{tpu_custom_call.1} parent=1 // pred_region
      %59 = vsyncadd [#allocation12], 0
      %s61 = sshll.u32 %s3, 4
      %s62 = int_to_ptr.hbm [resolvable:$true] %s61
      %64 = dma.hbm_to_smem %s62, 64, [#allocation11], [#allocation12]
    $region17: #{tpu_custom_call.1} parent=1 // pred_fallthru
      _
    // Predicated region
    $region18: #{tpu_custom_call.1} parent=1 // pred_check
      _
    $region19: #{tpu_custom_call.1} parent=1 // pred_check_branch
      %66 = sbr.rel (0) target = $region21
    $region20: #{tpu_custom_call.1} parent=1 // pred_region
      _
    $region21: #{tpu_custom_call.1} parent=1 // pred_fallthru
      _
    // Predicated region
    $region22: #{tpu_custom_call.1} parent=1 // pred_check
      _
    $region23: #{tpu_custom_call.1} parent=1 // pred_check_branch
      %68 = sbr.rel (0) target = $region25
    $region24: #{tpu_custom_call.1} parent=1 // pred_region
      %70 = vsyncadd [#allocation12], 0
      %s72 = sshll.u32 %s5, 4
      %s73 = int_to_ptr.hbm [resolvable:$true] %s72
      %75 = dma.hbm_to_smem %s73, 16, [#allocation13], [#allocation12]
    $region25: #{tpu_custom_call.1} parent=1 // pred_fallthru
      _
    // Predicated region
    $region26: #{tpu_custom_call.1} parent=1 // pred_check
      _
    $region27: #{tpu_custom_call.1} parent=1 // pred_check_branch
      %77 = sbr.rel (0) target = $region29
    $region28: #{tpu_custom_call.1} parent=1 // pred_region
      _
    $region29: #{tpu_custom_call.1} parent=1 // pred_fallthru
      _
    // Predicated region
    $region30: #{tpu_custom_call.1} parent=1 // pred_check
      _
    $region31: #{tpu_custom_call.1} parent=1 // pred_check_branch
      %79 = sbr.rel (0) target = $region33
    $region32: #{tpu_custom_call.1} parent=1 // pred_region
      %81 = vsyncadd [#allocation15], 0
      %s83 = sshll.u32 %s7, 4
      %s84 = int_to_ptr.hbm [resolvable:$true] %s83
      %86 = dma.hbm_to_smem %s84, 64, [#allocation14], [#allocation15]
    $region33: #{tpu_custom_call.1} parent=1 // pred_fallthru
      _
    // Predicated region
    $region34: #{tpu_custom_call.1} parent=1 // pred_check
      _
    $region35: #{tpu_custom_call.1} parent=1 // pred_check_branch
      %88 = sbr.rel (0) target = $region37
    $region36: #{tpu_custom_call.1} parent=1 // pred_region
      _
    $region37: #{tpu_custom_call.1} parent=1 // pred_fallthru
      _
    // Predicated region
    $region38: #{tpu_custom_call.1} parent=1 // pred_check
      _
    $region39: #{tpu_custom_call.1} parent=1 // pred_check_branch
      %90 = sbr.rel (0) target = $region41
    $region40: #{tpu_custom_call.1} parent=1 // pred_region
      _
    $region41: #{tpu_custom_call.1} parent=1 // pred_fallthru
      _
    // Predicated region
    $region42: #{tpu_custom_call.1} parent=1 // pred_check
      _
    $region43: #{tpu_custom_call.1} parent=1 // pred_check_branch
      %92 = sbr.rel (0) target = $region45
    $region44: #{tpu_custom_call.1} parent=1 // pred_region
      %94 = vsyncadd [#allocation10], 0
      %s95 = sshll.u32 %s10, 4
      %s96 = int_to_ptr.hbm [resolvable:$true] %s95
      %s97 = sshll.u32 [#allocation16], 4
      %s98 = int_to_ptr.vmem [resolvable:$true] %s97
      %103 = dma.hbm_to_vmem [thread:$0]  %s96, 4096, %s98, [#allocation10], 128, 128, 8
    $region45: #{tpu_custom_call.1} parent=1 // pred_fallthru
      _
    // Predicated region
    $region46: #{tpu_custom_call.1} parent=1 // pred_check
      _
    $region47: #{tpu_custom_call.1} parent=1 // pred_check_branch
      %105 = sbr.rel (0) target = $region49
    $region48: #{tpu_custom_call.1} parent=1 // pred_region
      _
    $region49: #{tpu_custom_call.1} parent=1 // pred_fallthru
      _
    // Predicated region
    $region50: #{tpu_custom_call.1} parent=1 // pred_check
      _
    $region51: #{tpu_custom_call.1} parent=1 // pred_check_branch
      %107 = sbr.rel (0) target = $region53
    $region52: #{tpu_custom_call.1} parent=1 // pred_region
      %109 = dma.done [#allocation5], 256
    $region53: #{tpu_custom_call.1} parent=1 // pred_fallthru
      _
    // Predicated region
    $region54: #{tpu_custom_call.1} parent=1 // pred_check
      _
    $region55: #{tpu_custom_call.1} parent=1 // pred_check_branch
      %111 = sbr.rel (0) target = $region57
    $region56: #{tpu_custom_call.1} parent=1 // pred_region
      %113 = dma.done [#allocation7], 16
    $region57: #{tpu_custom_call.1} parent=1 // pred_fallthru
      _
    // Predicated region
    $region58: #{tpu_custom_call.1} parent=1 // pred_check
      _
    $region59: #{tpu_custom_call.1} parent=1 // pred_check_branch
      %115 = sbr.rel (0) target = $region61
    $region60: #{tpu_custom_call.1} parent=1 // pred_region
      %117 = dma.done [#allocation10], 128
    $region61: #{tpu_custom_call.1} parent=1 // pred_fallthru
      _
    // Predicated region
    $region62: #{tpu_custom_call.1} parent=1 // pred_check
      _
    $region63: #{tpu_custom_call.1} parent=1 // pred_check_branch
      %119 = sbr.rel (0) target = $region65
    $region64: #{tpu_custom_call.1} parent=1 // pred_region
      %121 = dma.done [#allocation12], 64
    $region65: #{tpu_custom_call.1} parent=1 // pred_fallthru
      _
    // Predicated region
    $region66: #{tpu_custom_call.1} parent=1 // pred_check
      _
    $region67: #{tpu_custom_call.1} parent=1 // pred_check_branch
      %123 = sbr.rel (0) target = $region69
    $region68: #{tpu_custom_call.1} parent=1 // pred_region
      %125 = dma.done [#allocation12], 16
    $region69: #{tpu_custom_call.1} parent=1 // pred_fallthru
      _
    // Predicated region
    $region70: #{tpu_custom_call.1} parent=1 // pred_check
      _
    $region71: #{tpu_custom_call.1} parent=1 // pred_check_branch
      %127 = sbr.rel (0) target = $region73
    $region72: #{tpu_custom_call.1} parent=1 // pred_region
      %129 = dma.done [#allocation15], 64
    $region73: #{tpu_custom_call.1} parent=1 // pred_fallthru
      _
    // Predicated region
    $region74: #{tpu_custom_call.1} parent=1 // pred_check
      _
    $region75: #{tpu_custom_call.1} parent=1 // pred_check_branch
      %131 = sbr.rel (0) target = $region77
    $region76: #{tpu_custom_call.1} parent=1 // pred_region
      %133 = dma.done [#allocation10], 4096
    $region77: #{tpu_custom_call.1} parent=1 // pred_fallthru
      _
    %134 = sfence
    %v135 = vld [vmem:[#allocation4] sm:$0xff]
    %v136 = vld [vmem:[#allocation4 + $0x8] sm:$0xff]
    %v137 = vld [vmem:[%s9] sm:$0x3]
    %s138 = sld [smem:[#allocation8]]
    %v139 = vstv %s138
    %v140 = vmul.f32 %v139, %v135
    %v141 = vmul.f32 %v139, %v136
    %v142 = vld [vmem:[#allocation9] ss:$4 sm:$0x3]
    %v144 = vperm.slane %v142, 0
    %v145 = vperm.slane %v142, 1
    %v148 = vadd.f32 %v140, %v144
    %v149 = vadd.f32 %v141, %v145
    %v150 = vmax.f32 %v148, 0.0
    %v151 = vmax.f32 %v149, 0.0
    %s152 = sld [smem:[#allocation11]]
    %v153 = vstv %s152
    %v154 = vmul.f32 %v153, %v150
    %v155 = vmul.f32 %v153, %v151
    %s156 = sld [smem:[#allocation11 + $0x1]]
    %v157 = vstv %s156
    %v158 = vmul.f32 %v157, %v150
    %v159 = vmul.f32 %v157, %v151
    %s160 = sld [smem:[#allocation11 + $0x2]]
    %v161 = vstv %s160
    %v162 = vmul.f32 %v161, %v150
    %v163 = vmul.f32 %v161, %v151
    %s164 = sld [smem:[#allocation8 + $0x1]]
    %v165 = vstv %s164
    %v166 = vmul.f32 %v165, %v135
    %v167 = vmul.f32 %v165, %v136
    %s168 = scalar_lea.vmem [#allocation9], 1
    %v169 = vld [vmem:[%s168] ss:$4 sm:$0x3]
    %v171 = vperm.slane %v169, 0
    %v172 = vperm.slane %v169, 1
    %v175 = vadd.f32 %v166, %v171
    %v176 = vadd.f32 %v167, %v172
    %v177 = vmax.f32 %v175, 0.0
    %v178 = vmax.f32 %v176, 0.0
    %s179 = sld [smem:[#allocation11 + $0x80]]
    %v180 = vstv %s179
    %v181 = vmul.f32 %v180, %v177
    %v182 = vmul.f32 %v180, %v178
    %s183 = sld [smem:[#allocation11 + $0x81]]
    %v184 = vstv %s183
    %v185 = vmul.f32 %v184, %v177
    %v186 = vmul.f32 %v184, %v178
    %s187 = sld [smem:[#allocation11 + $0x82]]
    %v188 = vstv %s187
    %v189 = vmul.f32 %v188, %v177
    %v190 = vmul.f32 %v188, %v178
    %v191 = vadd.f32 %v154, %v181
    %v192 = vadd.f32 %v155, %v182
    %v193 = vadd.f32 %v158, %v185
    %v194 = vadd.f32 %v159, %v186
    %v195 = vadd.f32 %v162, %v189
    %v196 = vadd.f32 %v163, %v190
    %s197 = sld [smem:[#allocation8 + $0x2]]
    %v198 = vstv %s197
    %v199 = vmul.f32 %v198, %v135
    %v200 = vmul.f32 %v198, %v136
    %s201 = scalar_lea.vmem [#allocation9], 2
    %v202 = vld [vmem:[%s201] ss:$4 sm:$0x3]
    %v204 = vperm.slane %v202, 0
    %v205 = vperm.slane %v202, 1
    %v208 = vadd.f32 %v199, %v204
    %v209 = vadd.f32 %v200, %v205
    %v210 = vmax.f32 %v208, 0.0
    %v211 = vmax.f32 %v209, 0.0
    %s212 = sld [smem:[#allocation11 + $0x100]]
    %v213 = vstv %s212
    %v214 = vmul.f32 %v213, %v210
    %v215 = vmul.f32 %v213, %v211
    %s216 = sld [smem:[#allocation11 + $0x101]]
    %v217 = vstv %s216
    %v218 = vmul.f32 %v217, %v210
    %v219 = vmul.f32 %v217, %v211
    %s220 = sld [smem:[#allocation11 + $0x102]]
    %v221 = vstv %s220
    %v222 = vmul.f32 %v221, %v210
    %v223 = vmul.f32 %v221, %v211
    %v224 = vadd.f32 %v191, %v214
    %v225 = vadd.f32 %v192, %v215
    %v226 = vadd.f32 %v193, %v218
    %v227 = vadd.f32 %v194, %v219
    %v228 = vadd.f32 %v195, %v222
    %v229 = vadd.f32 %v196, %v223
    %s230 = sld [smem:[#allocation8 + $0x3]]
    %v231 = vstv %s230
    %v232 = vmul.f32 %v231, %v135
    %v233 = vmul.f32 %v231, %v136
    %s234 = scalar_lea.vmem [#allocation9], 3
    %v235 = vld [vmem:[%s234] ss:$4 sm:$0x3]
    %v237 = vperm.slane %v235, 0
    %v238 = vperm.slane %v235, 1
    %v241 = vadd.f32 %v232, %v237
    %v242 = vadd.f32 %v233, %v238
    %v243 = vmax.f32 %v241, 0.0
    %v244 = vmax.f32 %v242, 0.0
    %s245 = sld [smem:[#allocation11 + $0x180]]
    %v246 = vstv %s245
    %v247 = vmul.f32 %v246, %v243
    %v248 = vmul.f32 %v246, %v244
    %s249 = sld [smem:[#allocation11 + $0x181]]
    %v250 = vstv %s249
    %v251 = vmul.f32 %v250, %v243
    %v252 = vmul.f32 %v250, %v244
    %s253 = sld [smem:[#allocation11 + $0x182]]
    %v254 = vstv %s253
    %v255 = vmul.f32 %v254, %v243
    %v256 = vmul.f32 %v254, %v244
    %v257 = vadd.f32 %v224, %v247
    %v258 = vadd.f32 %v225, %v248
    %v259 = vadd.f32 %v226, %v251
    %v260 = vadd.f32 %v227, %v252
    %v261 = vadd.f32 %v228, %v255
    %v262 = vadd.f32 %v229, %v256
    %263 = vrot.lane.b32.xlu0 %v257, 1
    %v264 = vpop.permute.xlu0 %263
    %265 = vrot.lane.b32.xlu0 %v258, 1
    %v266 = vpop.permute.xlu0 %265
    %v267 = vlaneseq
    %v268 = vand.u32 %v267, 127
    %vm269 = vcmp.lt.s32.totalorder %v268, 1
    %v270 = vsel %vm269, %v264, %v266
    %v271 = vsel %vm269, %v266, %v264
    %v272 = vadd.f32 %v271, %v259
    %v273 = vadd.f32 %v270, %v260
    %274 = vrot.lane.b32.xlu0 %v261, 127
    %v275 = vpop.permute.xlu0 %274
    %276 = vrot.lane.b32.xlu0 %v262, 127
    %v277 = vpop.permute.xlu0 %276
    %vm278 = vcmp.lt.s32.totalorder %v268, 127
    %v279 = vsel %vm278, %v275, %v277
    %v280 = vsel %vm278, %v277, %v275
    %v281 = vadd.f32 %v272, %v279
    %v282 = vadd.f32 %v273, %v280
    %v283 = vadd.f32 %v281, %v135
    %v284 = vadd.f32 %v282, %v136
    %s285 = sld [smem:[#allocation2]]
    %v286 = vstv %s285
    %v287 = vadd.f32 %v283, %v286
    %v288 = vadd.f32 %v284, %v286
    %v289 = vmax.f32 %v287, 0.0
    %v290 = vmax.f32 %v288, 0.0
    %v292 = vperm.slane %v137, 0
    %v293 = vperm.slane %v137, 1
    %v296 = vmul.f32 %v289, %v292
    %v297 = vmul.f32 %v290, %v293
    %s298 = sld [smem:[#allocation13]]
    %v299 = vstv %s298
    %v300 = vmul.f32 %v299, %v296
    %v301 = vmul.f32 %v299, %v297
    %v302 = vld [vmem:[%s6] ss:$4 sm:$0x3]
    %v304 = vperm.slane %v302, 0
    %v305 = vperm.slane %v302, 1
    %v308 = vadd.f32 %v300, %v304
    %v309 = vadd.f32 %v301, %v305
    %v310 = vmax.f32 %v308, 0.0
    %v311 = vmax.f32 %v309, 0.0
    %s312 = sld [smem:[#allocation14]]
    %v313 = vstv %s312
    %v314 = vmul.f32 %v313, %v310
    %v315 = vmul.f32 %v313, %v311
    %s316 = sld [smem:[#allocation14 + $0x1]]
    %v317 = vstv %s316
    %v318 = vmul.f32 %v317, %v310
    %v319 = vmul.f32 %v317, %v311
    %s320 = sld [smem:[#allocation14 + $0x2]]
    %v321 = vstv %s320
    %v322 = vmul.f32 %v321, %v310
    %v323 = vmul.f32 %v321, %v311
    %s324 = sld [smem:[#allocation13 + $0x1]]
    %v325 = vstv %s324
    %v326 = vmul.f32 %v325, %v296
    %v327 = vmul.f32 %v325, %v297
    %s328 = scalar_lea.vmem %s6, 1
    %v329 = vld [vmem:[%s328] ss:$4 sm:$0x3]
    %v331 = vperm.slane %v329, 0
    %v332 = vperm.slane %v329, 1
    %v335 = vadd.f32 %v326, %v331
    %v336 = vadd.f32 %v327, %v332
    %v337 = vmax.f32 %v335, 0.0
    %v338 = vmax.f32 %v336, 0.0
    %s339 = sld [smem:[#allocation14 + $0x80]]
    %v340 = vstv %s339
    %v341 = vmul.f32 %v340, %v337
    %v342 = vmul.f32 %v340, %v338
    %s343 = sld [smem:[#allocation14 + $0x81]]
    %v344 = vstv %s343
    %v345 = vmul.f32 %v344, %v337
    %v346 = vmul.f32 %v344, %v338
    %s347 = sld [smem:[#allocation14 + $0x82]]
    %v348 = vstv %s347
    %v349 = vmul.f32 %v348, %v337
    %v350 = vmul.f32 %v348, %v338
    %v351 = vadd.f32 %v314, %v341
    %v352 = vadd.f32 %v315, %v342
    %v353 = vadd.f32 %v318, %v345
    %v354 = vadd.f32 %v319, %v346
    %v355 = vadd.f32 %v322, %v349
    %v356 = vadd.f32 %v323, %v350
    %s357 = sld [smem:[#allocation13 + $0x2]]
    %v358 = vstv %s357
    %v359 = vmul.f32 %v358, %v296
    %v360 = vmul.f32 %v358, %v297
    %s361 = scalar_lea.vmem %s6, 2
    %v362 = vld [vmem:[%s361] ss:$4 sm:$0x3]
    %v364 = vperm.slane %v362, 0
    %v365 = vperm.slane %v362, 1
    %v368 = vadd.f32 %v359, %v364
    %v369 = vadd.f32 %v360, %v365
    %v370 = vmax.f32 %v368, 0.0
    %v371 = vmax.f32 %v369, 0.0
    %s372 = sld [smem:[#allocation14 + $0x100]]
    %v373 = vstv %s372
    %v374 = vmul.f32 %v373, %v370
    %v375 = vmul.f32 %v373, %v371
    %s376 = sld [smem:[#allocation14 + $0x101]]
    %v377 = vstv %s376
    %v378 = vmul.f32 %v377, %v370
    %v379 = vmul.f32 %v377, %v371
    %s380 = sld [smem:[#allocation14 + $0x102]]
    %v381 = vstv %s380
    %v382 = vmul.f32 %v381, %v370
    %v383 = vmul.f32 %v381, %v371
    %v384 = vadd.f32 %v351, %v374
    %v385 = vadd.f32 %v352, %v375
    %v386 = vadd.f32 %v353, %v378
    %v387 = vadd.f32 %v354, %v379
    %v388 = vadd.f32 %v355, %v382
    %v389 = vadd.f32 %v356, %v383
    %s390 = sld [smem:[#allocation13 + $0x3]]
    %v391 = vstv %s390
    %v392 = vmul.f32 %v391, %v296
    %v393 = vmul.f32 %v391, %v297
    %s394 = scalar_lea.vmem %s6, 3
    %v395 = vld [vmem:[%s394] ss:$4 sm:$0x3]
    %v397 = vperm.slane %v395, 0
    %v398 = vperm.slane %v395, 1
    %v401 = vadd.f32 %v392, %v397
    %v402 = vadd.f32 %v393, %v398
    %v403 = vmax.f32 %v401, 0.0
    %v404 = vmax.f32 %v402, 0.0
    %s405 = sld [smem:[#allocation14 + $0x180]]
    %v406 = vstv %s405
    %v407 = vmul.f32 %v406, %v403
    %v408 = vmul.f32 %v406, %v404
    %s409 = sld [smem:[#allocation14 + $0x181]]
    %v410 = vstv %s409
    %v411 = vmul.f32 %v410, %v403
    %v412 = vmul.f32 %v410, %v404
    %s413 = sld [smem:[#allocation14 + $0x182]]
    %v414 = vstv %s413
    %v415 = vmul.f32 %v414, %v403
    %v416 = vmul.f32 %v414, %v404
    %v417 = vadd.f32 %v384, %v407
    %v418 = vadd.f32 %v385, %v408
    %v419 = vadd.f32 %v386, %v411
    %v420 = vadd.f32 %v387, %v412
    %v421 = vadd.f32 %v388, %v415
    %v422 = vadd.f32 %v389, %v416
    %423 = vrot.lane.b32.xlu0 %v417, 1
    %v424 = vpop.permute.xlu0 %423
    %425 = vrot.lane.b32.xlu0 %v418, 1
    %v426 = vpop.permute.xlu0 %425
    %v427 = vsel %vm269, %v424, %v426
    %v428 = vsel %vm269, %v426, %v424
    %v429 = vadd.f32 %v428, %v419
    %v430 = vadd.f32 %v427, %v420
    %431 = vrot.lane.b32.xlu0 %v421, 127
    %v432 = vpop.permute.xlu0 %431
    %433 = vrot.lane.b32.xlu0 %v422, 127
    %v434 = vpop.permute.xlu0 %433
    %v435 = vsel %vm278, %v432, %v434
    %v436 = vsel %vm278, %v434, %v432
    %v437 = vadd.f32 %v429, %v435
    %v438 = vadd.f32 %v430, %v436
    %v439 = vadd.f32 %v437, %v296
    %v440 = vadd.f32 %v438, %v297
    %s441 = sld [smem:[#allocation3]]
    %v442 = vstv %s441
    %v443 = vadd.f32 %v439, %v442
    %v444 = vadd.f32 %v440, %v442
    %v445 = vmax.f32 %v443, 0.0
    %v446 = vmax.f32 %v444, 0.0
    %v447 = vmul.f32 %v445, %v292
    %v448 = vmul.f32 %v446, %v293
    %v449 = vld [vmem:[#allocation16] sm:$0xff]
    %v450 = vld [vmem:[#allocation16 + $0x8] sm:$0xff]
    %v451 = vld [vmem:[#allocation16 + $0x10] sm:$0xff]
    %v452 = vld [vmem:[#allocation16 + $0x18] sm:$0xff]
    %v453 = vld [vmem:[#allocation16 + $0x20] sm:$0xff]
    %v454 = vld [vmem:[#allocation16 + $0x28] sm:$0xff]
    %v455 = vld [vmem:[#allocation16 + $0x30] sm:$0xff]
    %v456 = vld [vmem:[#allocation16 + $0x38] sm:$0xff]
    %v457 = vld [vmem:[#allocation16 + $0x40] sm:$0xff]
    %v458 = vld [vmem:[#allocation16 + $0x48] sm:$0xff]
    %v459 = vld [vmem:[#allocation16 + $0x50] sm:$0xff]
    %v460 = vld [vmem:[#allocation16 + $0x58] sm:$0xff]
    %v461 = vld [vmem:[#allocation16 + $0x60] sm:$0xff]
    %v462 = vld [vmem:[#allocation16 + $0x68] sm:$0xff]
    %v463 = vld [vmem:[#allocation16 + $0x70] sm:$0xff]
    %v464 = vld [vmem:[#allocation16 + $0x78] sm:$0xff]
    %v465 = vld [vmem:[#allocation16 + $0x80] sm:$0xff]
    %v466 = vld [vmem:[#allocation16 + $0x88] sm:$0xff]
    %v467 = vld [vmem:[#allocation16 + $0x90] sm:$0xff]
    %v468 = vld [vmem:[#allocation16 + $0x98] sm:$0xff]
    %v469 = vld [vmem:[#allocation16 + $0xa0] sm:$0xff]
    %v470 = vld [vmem:[#allocation16 + $0xa8] sm:$0xff]
    %v471 = vld [vmem:[#allocation16 + $0xb0] sm:$0xff]
    %v472 = vld [vmem:[#allocation16 + $0xb8] sm:$0xff]
    %v473 = vld [vmem:[#allocation16 + $0xc0] sm:$0xff]
    %v474 = vld [vmem:[#allocation16 + $0xc8] sm:$0xff]
    %v475 = vld [vmem:[#allocation16 + $0xd0] sm:$0xff]
    %v476 = vld [vmem:[#allocation16 + $0xd8] sm:$0xff]
    %v477 = vld [vmem:[#allocation16 + $0xe0] sm:$0xff]
    %v478 = vld [vmem:[#allocation16 + $0xe8] sm:$0xff]
    %v479 = vld [vmem:[#allocation16 + $0xf0] sm:$0xff]
    %v480 = vld [vmem:[#allocation16 + $0xf8] sm:$0xff]
    %v481 = vld [vmem:[%s11] sm:$0x1]
    %v483 = vperm.slane %v481, 0
    %485 = vmatpush.msra.mxu0 %v464
    %486 = vmatpush.msra.mxu0 %v463
    %487 = vmatpush.msra.mxu0 %v462
    %488 = vmatpush.msra.mxu0 %v461
    %489 = vmatpush.msra.mxu0 %v460
    %490 = vmatpush.msra.mxu0 %v459
    %491 = vmatpush.msra.mxu0 %v458
    %492 = vmatpush.msra.mxu0 %v457
    %493 = vmatpush.msra.mxu0 %v456
    %494 = vmatpush.msra.mxu0 %v455
    %495 = vmatpush.msra.mxu0 %v454
    %496 = vmatpush.msra.mxu0 %v453
    %497 = vmatpush.msra.mxu0 %v452
    %498 = vmatpush.msra.mxu0 %v451
    %499 = vmatpush.msra.mxu0 %v450
    %500 = vmatpush.msra.mxu0 %v449
    %501 = vmatmul.f32.gmra.mxu0 %v447
    %v502 = vpop.f32.mrf.mxu0
    %v503 = vadd.f32 %v483, %v502
    %504 = vdwg.mxu0
    %505 = vmatpush.msra.mxu0 %v480
    %506 = vmatpush.msra.mxu0 %v479
    %507 = vmatpush.msra.mxu0 %v478
    %508 = vmatpush.msra.mxu0 %v477
    %509 = vmatpush.msra.mxu0 %v476
    %510 = vmatpush.msra.mxu0 %v475
    %511 = vmatpush.msra.mxu0 %v474
    %512 = vmatpush.msra.mxu0 %v473
    %513 = vmatpush.msra.mxu0 %v472
    %514 = vmatpush.msra.mxu0 %v471
    %515 = vmatpush.msra.mxu0 %v470
    %516 = vmatpush.msra.mxu0 %v469
    %517 = vmatpush.msra.mxu0 %v468
    %518 = vmatpush.msra.mxu0 %v467
    %519 = vmatpush.msra.mxu0 %v466
    %520 = vmatpush.msra.mxu0 %v465
    %521 = vmatmul.f32.gmra.mxu0 %v448
    %v522 = vpop.f32.mrf.mxu0
    %v523 = vadd.f32 %v503, %v522
    %524 = vdwg.mxu0
    %525 = vst [vmem:[#allocation17] sm:$0xff] %v523
    // Predicated region
    $region78: #{tpu_custom_call.1} parent=1 // pred_check
      _
    $region79: #{tpu_custom_call.1} parent=1 // pred_check_branch
      %527 = sbr.rel (0) target = $region81
    $region80: #{tpu_custom_call.1} parent=1 // pred_region
      %529 = vsyncadd [#allocation6], 0
      %s531 = sshll.u32 [#allocation17], 4
      %s532 = int_to_ptr.vmem [resolvable:$true] %s531
      %s533 = sshll.u32 %s12, 4
      %s534 = int_to_ptr.hbm [resolvable:$true] %s533
      %536 = dma.vmem_to_hbm [thread:$0]  %s532, 128, %s534, [#allocation6]
    $region81: #{tpu_custom_call.1} parent=1 // pred_fallthru
      _
    // Predicated region
    $region82: #{tpu_custom_call.1} parent=1 // pred_check
      _
    $region83: #{tpu_custom_call.1} parent=1 // pred_check_branch
      %538 = sbr.rel (0) target = $region85
    $region84: #{tpu_custom_call.1} parent=1 // pred_region
      %540 = dma.done [#allocation6], 128
    $region85: #{tpu_custom_call.1} parent=1 // pred_fallthru
      _
    %541 = vsyncpa [#allocation5], 1
    %542 = vsyncpa [#allocation10], 1
    %543 = vsyncpa [#allocation6], 1
    %544 = vsyncpa [#allocation7], 1
    %545 = vsyncpa [#allocation12], 1
    %546 = vsyncpa [#allocation15], 1

</llo_original>
